<compile_context>
chip_gen: v5e
topology: v5e:2x2
jax: 0.10.0
libtpu: 0.0.40
codegen_flags: <defaults>
</compile_context>

<pallas_src>
from functools import partial

import jax
import jax.numpy as jnp
from jax.experimental import pallas as pl
from jax.experimental.pallas import tpu as pltpu


def _logsumexp_last(a):
    m = jnp.max(a, axis=-1)
    return m + jnp.log(jnp.sum(jnp.exp(a - m[..., None]), axis=-1))


def _pick_col_tile(B, D, R, V, *, budget_bytes, target_col_tiles=2):
    """Choose a (CR ranks x VT vocab columns) W column tile.

    Honest per-grid-step VMEM accounting: double-buffered bf16 W tile, f32
    bias tile, ~4 f32 (B, VT) logits temporaries, the resident bf16 x block,
    and the small y / output / scratch buffers.

    Preference order:
      1. whole-V tiles with the largest rank group that still leaves
         >= target_col_tiles column tiles (feeds both v7x TensorCores);
      2. whole-V tiles with the largest fitting rank group;
      3. single-rank sub-V tiles (online logsumexp across vocab tiles);
      4. hard error (no silent full-width fallback).
    """
    def step_bytes(cr, vt):
        w_tile = 2 * (cr * D * vt) * 2        # bf16 W tile, double-buffered
        b_tile = 2 * (cr * vt) * 4            # f32 bias tile, double-buffered
        tmps = 4 * (B * vt) * 4               # f32 logits + exp/where temporaries
        x_res = 2 * (B * D) * 2               # resident bf16 activations
        small = 2 * (B * 128) * 4             # lane-replicated targets
        small += 2 * (2 * B * cr) * 4         # output block
        small += 4 * (B * 128) * 4            # lane-padded accumulator scratch
        return w_tile + b_tile + tmps + x_res + small

    whole_v = [cr for cr in range(R, 0, -1)
               if R % cr == 0 and step_bytes(cr, V) <= budget_bytes]
    if whole_v:                               # sorted largest -> smallest
        for cr in whole_v:
            if R // cr >= target_col_tiles:
                return cr, V
        return whole_v[0], V                  # fits, but R too small to split

    sub_v = [vt for vt in range((V // 128) * 128, 0, -128)
             if V % vt == 0 and step_bytes(1, vt) <= budget_bytes]
    if sub_v:
        return 1, sub_v[0]

    raise ValueError(
        f"TJDist Pallas kernel: no (rank, vocab) column tile fits the VMEM "
        f"budget ({budget_bytes} B) for B={B}, D={D}, R={R}, V={V}. "
        f"Raise tile_budget_bytes / vmem_limit_bytes or shrink the batch.")


@partial(jax.jit, static_argnames=("rank", "vocab_size", "col_ranks", "vocab_tile",
                                   "tile_budget_bytes", "vmem_limit_bytes"))
def tjdist_forward(x, y, w, b, *, rank, vocab_size,
                   col_ranks=None, vocab_tile=None,
                   tile_budget_bytes=16 * 1024 * 1024,
                   vmem_limit_bytes=32 * 1024 * 1024):
    """Pallas implementation of TJDist.forward.

    Args:
      x: (B, D) float32 last hidden states.
      y: (B, H) int32 target labels in [0, vocab_size).
      w: (H, R, D, V) float32 TensorParamNet weight, per-(horizon, rank) slice.
      b: (H, R, 1, V) float32 TensorParamNet bias, per-(horizon, rank) slice.
      col_ranks / vocab_tile: optional explicit column tile (CR, VT); when
        omitted a VMEM-budgeted tile is chosen automatically.
      tile_budget_bytes / vmem_limit_bytes: defaults are v7x-safe (64 MiB
        physical VMEM); raise both on v5e/v6e (128 MiB physical) to get wider
        tiles and fewer grid steps.

    Returns:
      loss: (B,) float32.
      ok:   () bool — lazy mirror of the module's NaN / p_tilde<=z_tilde checks.

    Note: the kernel is HBM-bound on the W stream; callers should flatten
    batch x positions into B (arithmetic intensity scales ~linearly with B).
    """
    B, D = x.shape
    H = y.shape[1]
    R, V = rank, vocab_size
    assert w.shape == (H, R, D, V), w.shape
    assert b.shape == (H, R, 1, V), b.shape
    assert B % 8 == 0, "batch must be a multiple of 8 (sublane constraint)"

    if (col_ranks is None) != (vocab_tile is None):
        raise ValueError("col_ranks and vocab_tile must be provided together")
    if col_ranks is None:
        CR, VT = _pick_col_tile(B, D, R, V, budget_bytes=tile_budget_bytes)
    else:
        CR, VT = int(col_ranks), int(vocab_tile)
    if R % CR or V % VT or not (VT == V or VT % 128 == 0):
        raise ValueError(f"illegal column tile CR={CR}, VT={VT} for R={R}, V={V}")
    NR, NV = R // CR, V // VT      # rank tiles (parallel), vocab tiles (reduction)

    # --- tiny wrapper-side glue ----------------------------------------------
    x_bf16 = x.astype(jnp.bfloat16)            # cast once; native MXU operand
    w_bf16 = w.astype(jnp.bfloat16)            # halves the dominant HBM stream
    # lane-replicated targets (H, B, 128) i32: lets the kernel build the exact
    # one-hot selection along V without an HBM one-hot or an SMEM gather.
    y_lanes = jnp.broadcast_to(
        jnp.transpose(y, (1, 0))[:, :, None], (H, B, 128)).astype(jnp.int32)

    def kernel(x_ref, w_ref, b_ref, y_ref, out_ref, acc_p, acc_z, m_s, s_s):
        h = pl.program_id(1)
        v = pl.program_id(2)

        @pl.when(jnp.logical_and(h == 0, v == 0))
        def _init_rank_tile():                 # new rank tile: reset horizon sums
            acc_p[...] = jnp.zeros_like(acc_p)
            acc_z[...] = jnp.zeros_like(acc_z)

        @pl.when(v == 0)
        def _init_online():                    # new horizon step: reset LSE state
            m_s[...] = jnp.full_like(m_s, -jnp.inf)
            s_s[...] = jnp.zeros_like(s_s)

        xb = x_ref[...]                                              # (B, D) bf16
        y_col = y_ref[0][:, 0:1]                                     # (B, 1) i32
        v_ids = v * VT + jax.lax.broadcasted_iota(jnp.int32, (B, VT), 1)
        sel = v_ids == y_col                                         # (B, VT) bool

        for c in range(CR):                                          # static unroll
            # Native bf16 x bf16 MXU matmul with f32 accumulation; bias in f32.
            lg = jnp.dot(xb, w_ref[0, c],
                         preferred_element_type=jnp.float32) + b_ref[0, c]
            # Selected logit: the target lands in exactly one vocab tile, so a
            # plain masked sum accumulates correctly across both v and h.
            logp_c = jnp.sum(jnp.where(sel, lg, 0.0), axis=-1, keepdims=True)
            mx_c = jnp.max(lg, axis=-1, keepdims=True)               # (B, 1)
            se_c = jnp.sum(jnp.exp(lg - mx_c), axis=-1, keepdims=True)

            acc_p[:, c:c + 1] += logp_c
            # Online logsumexp merge across vocab tiles (running max / sumexp).
            m_prev = m_s[:, c:c + 1]
            m_new = jnp.maximum(m_prev, mx_c)
            s_s[:, c:c + 1] = (s_s[:, c:c + 1] * jnp.exp(m_prev - m_new)
                               + se_c * jnp.exp(mx_c - m_new))
            m_s[:, c:c + 1] = m_new

        @pl.when(v == NV - 1)
        def _finish_horizon_step():
            acc_z[...] += m_s[...] + jnp.log(s_s[...])

        @pl.when(jnp.logical_and(h == H - 1, v == NV - 1))
        def _write_output():                   # single store per rank tile
            out_ref[0, 0] = acc_p[...]
            out_ref[1, 0] = acc_z[...]

    grid_spec = pltpu.PrefetchScalarGridSpec(
        num_scalar_prefetch=0,
        grid=(NR, H, NV),                      # (parallel, reduction, reduction)
        in_specs=[
            pl.BlockSpec((B, D), lambda r, h, v: (0, 0)),                 # x (resident)
            # W tile (bf16). If a trace shows exposed DMA-start latency on a
            # short grid, add pipeline_mode=pl.Buffered(3) here (VMEM allowing).
            pl.BlockSpec((1, CR, D, VT), lambda r, h, v: (h, r, 0, v)),
            pl.BlockSpec((1, CR, 1, VT), lambda r, h, v: (h, r, 0, v)),   # bias tile
            pl.BlockSpec((1, B, 128), lambda r, h, v: (h, 0, 0)),         # y[:, h] lanes
        ],
        out_specs=pl.BlockSpec((2, 1, B, CR), lambda r, h, v: (0, r, 0, 0)),
        scratch_shapes=[pltpu.VMEM((B, CR), jnp.float32)] * 4,
    )

    acc = pl.pallas_call(
        kernel,
        out_shape=jax.ShapeDtypeStruct((2, NR, B, CR), jnp.float32),
        grid_spec=grid_spec,
        compiler_params=pltpu.CompilerParams(
            dimension_semantics=("parallel", "arbitrary", "arbitrary"),
            vmem_limit_bytes=vmem_limit_bytes,
        ),
    )(x_bf16, w_bf16, b, y_lanes)

    # Tiny epilogue on (B, R): combine ranks in log space (no host syncs).
    acc = jnp.transpose(acc, (0, 2, 1, 3)).reshape(2, B, R)
    logp_rank, logz_rank = acc[0], acc[1]      # sum_h selected-logit / logsumexp
    log_p_tilde = _logsumexp_last(logp_rank)   # (B,)
    log_z_tilde = _logsumexp_last(logz_rank)   # (B,)
    loss = log_z_tilde - log_p_tilde           # -log p_tilde + log z_tilde

    finite = jnp.isfinite(logp_rank).all() & jnp.isfinite(logz_rank).all()
    ordered = jnp.all(log_p_tilde <= log_z_tilde + 1e-5)
    ok = finite & ordered
    return loss, ok


def _reference_forward(x, y, w, b, *, rank, vocab_size):
    """Pure-JAX reference of the same semantics (linear space, toy scale).

    Applies the same bf16 rounding to x and W that the kernel uses, so the
    comparison is apples-to-apples."""
    B, D = x.shape
    H = y.shape[1]
    R, V = rank, vocab_size
    xq = x.astype(jnp.bfloat16).astype(jnp.float32)
    wq = w.astype(jnp.bfloat16).astype(jnp.float32)
    logits = jnp.einsum('bd,hrdv->bhrv', xq, wq,
                        precision=jax.lax.Precision.HIGHEST) + b[None, :, :, 0, :]
    theta = jnp.exp(logits)                                           # (B,H,R,V)
    oh = jax.nn.one_hot(y, V, dtype=jnp.float32)                      # (B,H,V)
    p_sel = jnp.sum(theta * oh[:, :, None, :], axis=-1)               # (B,H,R)
    z_h = jnp.sum(theta, axis=-1)                                     # (B,H,R)
    p_tilde = jnp.sum(jnp.prod(p_sel, axis=1), axis=-1)               # (B,)
    z_tilde = jnp.sum(jnp.prod(z_h, axis=1), axis=-1)                 # (B,)
    return -jnp.log(p_tilde) + jnp.log(z_tilde)


if __name__ == "__main__":
    # Small config: vocab_size=256, horizon=4, rank=4, hidden D=32, batch B=8.
    B, D, H, R, V = 8, 32, 4, 4, 256

    key = jax.random.PRNGKey(0)
    kx, kw, kb, ky = jax.random.split(key, 4)

    x = jax.random.normal(kx, (B, D), dtype=jnp.float32)
    # Deterministic synthetic TensorParamNet parameters (Linear D -> H*R*V),
    # pre-reshaped to per-(horizon, rank) layout (H, R, D, V) / (H, R, 1, V).
    w = jax.random.normal(kw, (H, R, D, V), dtype=jnp.float32) * 0.02
    b = jax.random.normal(kb, (H, R, 1, V), dtype=jnp.float32) * 0.01
    y = jax.random.randint(ky, (B, H), 0, V, dtype=jnp.int32)

    loss_ref = _reference_forward(x, y, w, b, rank=R, vocab_size=V)

    # 1) Auto tiling: whole-V column tiles, >= 2 parallel rank tiles.
    loss, ok = tjdist_forward(x, y, w, b, rank=R, vocab_size=V)
    loss = jax.block_until_ready(loss)
    assert loss.shape == (B,)
    # Demo-only host checks (the jitted forward itself never syncs).
    assert bool(ok), "NaN / p_tilde <= norm_const check failed"
    assert jnp.allclose(loss, loss_ref, rtol=5e-3, atol=5e-3), (loss, loss_ref)

    # 2) Forced vocab tiling: exercises the online-logsumexp V-tile path.
    loss_vt, ok_vt = tjdist_forward(x, y, w, b, rank=R, vocab_size=V,
                                    col_ranks=1, vocab_tile=128)
    loss_vt = jax.block_until_ready(loss_vt)
    assert bool(ok_vt), "NaN / p_tilde <= norm_const check failed (V-tiled)"
    assert jnp.allclose(loss_vt, loss_ref, rtol=5e-3, atol=5e-3), (loss_vt, loss_ref)

    print("KERNEL_OK")
</pallas_src>

<mosaic_0001>
module attributes {stable_mosaic.version = 11 : i64} {
  func.func @kernel(%arg0: i32, %arg1: i32, %arg2: i32, %arg3: memref<8x32xbf16, #tpu.memory_space<vmem>>, %arg4: memref<1x2x32x256xbf16, #tpu.memory_space<vmem>>, %arg5: memref<1x2x1x256xf32, #tpu.memory_space<vmem>>, %arg6: memref<1x8x128xi32, #tpu.memory_space<vmem>>, %arg7: memref<2x1x8x2xf32, #tpu.memory_space<vmem>>, %arg8: memref<8x2xf32, #tpu.memory_space<vmem>>, %arg9: memref<8x2xf32, #tpu.memory_space<vmem>>, %arg10: memref<8x2xf32, #tpu.memory_space<vmem>>, %arg11: memref<8x2xf32, #tpu.memory_space<vmem>>) attributes {dimension_semantics = [#tpu.dimension_semantics<parallel>, #tpu.dimension_semantics<arbitrary>, #tpu.dimension_semantics<arbitrary>], iteration_bounds = array<i64: 2, 4, 1>, scalar_prefetch = 0 : i64, scratch_operands = 4 : i64, tpu.core_type = #tpu.core_type<tc>, window_params = [{pipeline_mode = #tpu.pipeline_mode<synchronous>, transform_indices = @transform_0, window_bounds = array<i64: 8, 32>}, {transform_indices = @transform_1, window_bounds = array<i64: 1, 2, 32, 256>}, {transform_indices = @transform_2, window_bounds = array<i64: 1, 2, 1, 256>}, {transform_indices = @transform_3, window_bounds = array<i64: 1, 8, 128>}, {transform_indices = @transform_4, window_bounds = array<i64: 2, 1, 8, 2>}]} {
    %c0_i32 = arith.constant 0 : i32
    %0 = arith.cmpi eq, %arg1, %c0_i32 : i32
    %c0_i32_0 = arith.constant 0 : i32
    %1 = arith.cmpi eq, %arg2, %c0_i32_0 : i32
    %2 = arith.andi %0, %1 : i1
    %3 = arith.extui %2 : i1 to i32
    %c0_i32_1 = arith.constant 0 : i32
    %4 = arith.cmpi ne, %3, %c0_i32_1 : i32
    scf.if %4 {
      %cst_60 = arith.constant 0.000000e+00 : f32
      %92 = vector.broadcast %cst_60 : f32 to vector<8x2xf32>
      %c0_61 = arith.constant 0 : index
      %c0_62 = arith.constant 0 : index
      %93 = vector.load %arg8[%c0_61, %c0_62] : memref<8x2xf32, #tpu.memory_space<vmem>>, vector<8x2xf32>
      tpu.vector_store %arg8[%c0_61, %c0_62], %92 {strides = array<i32>} : memref<8x2xf32, #tpu.memory_space<vmem>>, vector<8x2xf32>,
      %cst_63 = arith.constant 0.000000e+00 : f32
      %94 = vector.broadcast %cst_63 : f32 to vector<8x2xf32>
      %c0_64 = arith.constant 0 : index
      %c0_65 = arith.constant 0 : index
      %95 = vector.load %arg9[%c0_64, %c0_65] : memref<8x2xf32, #tpu.memory_space<vmem>>, vector<8x2xf32>
      tpu.vector_store %arg9[%c0_64, %c0_65], %94 {strides = array<i32>} : memref<8x2xf32, #tpu.memory_space<vmem>>, vector<8x2xf32>,
    } else {
    }
    %c0_i32_2 = arith.constant 0 : i32
    %5 = arith.cmpi eq, %arg2, %c0_i32_2 : i32
    %6 = arith.extui %5 : i1 to i32
    %c0_i32_3 = arith.constant 0 : i32
    %7 = arith.cmpi ne, %6, %c0_i32_3 : i32
    scf.if %7 {
      %cst_60 = arith.constant 0xFF800000 : f32
      %92 = vector.broadcast %cst_60 : f32 to vector<8x2xf32>
      %c0_61 = arith.constant 0 : index
      %c0_62 = arith.constant 0 : index
      %93 = vector.load %arg10[%c0_61, %c0_62] : memref<8x2xf32, #tpu.memory_space<vmem>>, vector<8x2xf32>
      tpu.vector_store %arg10[%c0_61, %c0_62], %92 {strides = array<i32>} : memref<8x2xf32, #tpu.memory_space<vmem>>, vector<8x2xf32>,
      %cst_63 = arith.constant 0.000000e+00 : f32
      %94 = vector.broadcast %cst_63 : f32 to vector<8x2xf32>
      %c0_64 = arith.constant 0 : index
      %c0_65 = arith.constant 0 : index
      %95 = vector.load %arg11[%c0_64, %c0_65] : memref<8x2xf32, #tpu.memory_space<vmem>>, vector<8x2xf32>
      tpu.vector_store %arg11[%c0_64, %c0_65], %94 {strides = array<i32>} : memref<8x2xf32, #tpu.memory_space<vmem>>, vector<8x2xf32>,
    } else {
    }
    %c0 = arith.constant 0 : index
    %c0_4 = arith.constant 0 : index
    %8 = vector.load %arg3[%c0, %c0_4] : memref<8x32xbf16, #tpu.memory_space<vmem>>, vector<8x32xbf16>
    %c0_5 = arith.constant 0 : index
    %c0_6 = arith.constant 0 : index
    %c0_7 = arith.constant 0 : index
    %9 = vector.load %arg6[%c0_5, %c0_6, %c0_7] : memref<1x8x128xi32, #tpu.memory_space<vmem>>, vector<1x8x128xi32>
    %10 = vector.shape_cast %9 : vector<1x8x128xi32> to vector<8x128xi32>
    %11 = vector.extract_strided_slice %10 {offsets = [0, 0], sizes = [8, 1], strides = [1, 1]} : vector<8x128xi32> to vector<8x1xi32>
    %c256_i32 = arith.constant 256 : i32
    %12 = arith.muli %arg2, %c256_i32 : i32
    %13 = tpu.iota {dimensions = array<i32: 1>} : vector<8x256xi32>
    %14 = vector.broadcast %12 : i32 to vector<8x256xi32>
    %15 = arith.addi %14, %13 : vector<8x256xi32>
    %16 = vector.broadcast %11 : vector<8x1xi32> to vector<8x256xi32>
    %17 = arith.cmpi eq, %15, %16 : vector<8x256xi32>
    %c0_8 = arith.constant 0 : index
    %c0_9 = arith.constant 0 : index
    %c0_10 = arith.constant 0 : index
    %c0_11 = arith.constant 0 : index
    %18 = vector.load %arg4[%c0_8, %c0_9, %c0_10, %c0_11] : memref<1x2x32x256xbf16, #tpu.memory_space<vmem>>, vector<1x1x32x256xbf16>
    %19 = vector.shape_cast %18 : vector<1x1x32x256xbf16> to vector<32x256xbf16>
    %cst = arith.constant dense<0.000000e+00> : vector<8x256xf32>
    %20 = tpu.matmul %8, %19, %cst {dimension_numbers = #tpu.dot_dimension_numbers<[1], [0], [0], [1], [0, 0, 1, 1], [], []>} : vector<8x32xbf16>, vector<32x256xbf16>, vector<8x256xf32> -> vector<8x256xf32>
    %c0_12 = arith.constant 0 : index
    %c0_13 = arith.constant 0 : index
    %c0_14 = arith.constant 0 : index
    %c0_15 = arith.constant 0 : index
    %21 = vector.load %arg5[%c0_12, %c0_13, %c0_14, %c0_15] : memref<1x2x1x256xf32, #tpu.memory_space<vmem>>, vector<1x1x1x256xf32>
    %22 = vector.shape_cast %21 : vector<1x1x1x256xf32> to vector<1x256xf32>
    %23 = vector.broadcast %22 : vector<1x256xf32> to vector<8x256xf32>
    %24 = arith.addf %20, %23 : vector<8x256xf32>
    %cst_16 = arith.constant 0.000000e+00 : f32
    %25 = vector.broadcast %cst_16 : f32 to vector<8x256xf32>
    %26 = arith.select %17, %24, %25 : vector<8x256xi1>, vector<8x256xf32>
    %cst_17 = arith.constant dense<0.000000e+00> : vector<8xf32>
    %27 = vector.multi_reduction <add>, %26, %cst_17 [1] : vector<8x256xf32> to vector<8xf32>
    %28 = vector.shape_cast %27 : vector<8xf32> to vector<8x1xf32>
    %cst_18 = arith.constant dense<0xFF800000> : vector<8xf32>
    %29 = vector.multi_reduction <maximumf>, %24, %cst_18 [1] : vector<8x256xf32> to vector<8xf32>
    %30 = vector.shape_cast %29 : vector<8xf32> to vector<8x1xf32>
    %31 = vector.broadcast %30 : vector<8x1xf32> to vector<8x256xf32>
    %32 = arith.subf %24, %31 : vector<8x256xf32>
    %33 = math.exp %32 : vector<8x256xf32>
    %cst_19 = arith.constant dense<0.000000e+00> : vector<8xf32>
    %34 = vector.multi_reduction <add>, %33, %cst_19 [1] : vector<8x256xf32> to vector<8xf32>
    %35 = vector.shape_cast %34 : vector<8xf32> to vector<8x1xf32>
    %c0_20 = arith.constant 0 : index
    %c0_21 = arith.constant 0 : index
    %36 = vector.load %arg8[%c0_20, %c0_21] : memref<8x2xf32, #tpu.memory_space<vmem>>, vector<8x1xf32>
    %37 = arith.addf %36, %28 : vector<8x1xf32>
    %c0_22 = arith.constant 0 : index
    %c0_23 = arith.constant 0 : index
    %38 = vector.load %arg8[%c0_22, %c0_23] : memref<8x2xf32, #tpu.memory_space<vmem>>, vector<8x1xf32>
    tpu.vector_store %arg8[%c0_22, %c0_23], %37 {strides = array<i32>} : memref<8x2xf32, #tpu.memory_space<vmem>>, vector<8x1xf32>,
    %c0_24 = arith.constant 0 : index
    %c0_25 = arith.constant 0 : index
    %39 = vector.load %arg10[%c0_24, %c0_25] : memref<8x2xf32, #tpu.memory_space<vmem>>, vector<8x1xf32>
    %40 = arith.maximumf %39, %30 : vector<8x1xf32>
    %c0_26 = arith.constant 0 : index
    %c0_27 = arith.constant 0 : index
    %41 = vector.load %arg11[%c0_26, %c0_27] : memref<8x2xf32, #tpu.memory_space<vmem>>, vector<8x1xf32>
    %42 = arith.subf %39, %40 : vector<8x1xf32>
    %43 = math.exp %42 : vector<8x1xf32>
    %44 = arith.mulf %41, %43 : vector<8x1xf32>
    %45 = arith.subf %30, %40 : vector<8x1xf32>
    %46 = math.exp %45 : vector<8x1xf32>
    %47 = arith.mulf %35, %46 : vector<8x1xf32>
    %48 = arith.addf %44, %47 : vector<8x1xf32>
    %c0_28 = arith.constant 0 : index
    %c0_29 = arith.constant 0 : index
    %49 = vector.load %arg11[%c0_28, %c0_29] : memref<8x2xf32, #tpu.memory_space<vmem>>, vector<8x1xf32>
    tpu.vector_store %arg11[%c0_28, %c0_29], %48 {strides = array<i32>} : memref<8x2xf32, #tpu.memory_space<vmem>>, vector<8x1xf32>,
    %c0_30 = arith.constant 0 : index
    %c0_31 = arith.constant 0 : index
    %50 = vector.load %arg10[%c0_30, %c0_31] : memref<8x2xf32, #tpu.memory_space<vmem>>, vector<8x1xf32>
    tpu.vector_store %arg10[%c0_30, %c0_31], %40 {strides = array<i32>} : memref<8x2xf32, #tpu.memory_space<vmem>>, vector<8x1xf32>,
    %c0_32 = arith.constant 0 : index
    %c1 = arith.constant 1 : index
    %c0_33 = arith.constant 0 : index
    %c0_34 = arith.constant 0 : index
    %51 = vector.load %arg4[%c0_32, %c1, %c0_33, %c0_34] : memref<1x2x32x256xbf16, #tpu.memory_space<vmem>>, vector<1x1x32x256xbf16>
    %52 = vector.shape_cast %51 : vector<1x1x32x256xbf16> to vector<32x256xbf16>
    %cst_35 = arith.constant dense<0.000000e+00> : vector<8x256xf32>
    %53 = tpu.matmul %8, %52, %cst_35 {dimension_numbers = #tpu.dot_dimension_numbers<[1], [0], [0], [1], [0, 0, 1, 1], [], []>} : vector<8x32xbf16>, vector<32x256xbf16>, vector<8x256xf32> -> vector<8x256xf32>
    %c0_36 = arith.constant 0 : index
    %c1_37 = arith.constant 1 : index
    %c0_38 = arith.constant 0 : index
    %c0_39 = arith.constant 0 : index
    %54 = vector.load %arg5[%c0_36, %c1_37, %c0_38, %c0_39] : memref<1x2x1x256xf32, #tpu.memory_space<vmem>>, vector<1x1x1x256xf32>
    %55 = vector.shape_cast %54 : vector<1x1x1x256xf32> to vector<1x256xf32>
    %56 = vector.broadcast %55 : vector<1x256xf32> to vector<8x256xf32>
    %57 = arith.addf %53, %56 : vector<8x256xf32>
    %cst_40 = arith.constant 0.000000e+00 : f32
    %58 = vector.broadcast %cst_40 : f32 to vector<8x256xf32>
    %59 = arith.select %17, %57, %58 : vector<8x256xi1>, vector<8x256xf32>
    %cst_41 = arith.constant dense<0.000000e+00> : vector<8xf32>
    %60 = vector.multi_reduction <add>, %59, %cst_41 [1] : vector<8x256xf32> to vector<8xf32>
    %61 = vector.shape_cast %60 : vector<8xf32> to vector<8x1xf32>
    %cst_42 = arith.constant dense<0xFF800000> : vector<8xf32>
    %62 = vector.multi_reduction <maximumf>, %57, %cst_42 [1] : vector<8x256xf32> to vector<8xf32>
    %63 = vector.shape_cast %62 : vector<8xf32> to vector<8x1xf32>
    %64 = vector.broadcast %63 : vector<8x1xf32> to vector<8x256xf32>
    %65 = arith.subf %57, %64 : vector<8x256xf32>
    %66 = math.exp %65 : vector<8x256xf32>
    %cst_43 = arith.constant dense<0.000000e+00> : vector<8xf32>
    %67 = vector.multi_reduction <add>, %66, %cst_43 [1] : vector<8x256xf32> to vector<8xf32>
    %68 = vector.shape_cast %67 : vector<8xf32> to vector<8x1xf32>
    %c0_44 = arith.constant 0 : index
    %c1_45 = arith.constant 1 : index
    %69 = vector.load %arg8[%c0_44, %c1_45] : memref<8x2xf32, #tpu.memory_space<vmem>>, vector<8x1xf32>
    %70 = arith.addf %69, %61 : vector<8x1xf32>
    %c0_46 = arith.constant 0 : index
    %c1_47 = arith.constant 1 : index
    %71 = vector.load %arg8[%c0_46, %c1_47] : memref<8x2xf32, #tpu.memory_space<vmem>>, vector<8x1xf32>
    tpu.vector_store %arg8[%c0_46, %c1_47], %70 {strides = array<i32>} : memref<8x2xf32, #tpu.memory_space<vmem>>, vector<8x1xf32>,
    %c0_48 = arith.constant 0 : index
    %c1_49 = arith.constant 1 : index
    %72 = vector.load %arg10[%c0_48, %c1_49] : memref<8x2xf32, #tpu.memory_space<vmem>>, vector<8x1xf32>
    %73 = arith.maximumf %72, %63 : vector<8x1xf32>
    %c0_50 = arith.constant 0 : index
    %c1_51 = arith.constant 1 : index
    %74 = vector.load %arg11[%c0_50, %c1_51] : memref<8x2xf32, #tpu.memory_space<vmem>>, vector<8x1xf32>
    %75 = arith.subf %72, %73 : vector<8x1xf32>
    %76 = math.exp %75 : vector<8x1xf32>
    %77 = arith.mulf %74, %76 : vector<8x1xf32>
    %78 = arith.subf %63, %73 : vector<8x1xf32>
    %79 = math.exp %78 : vector<8x1xf32>
    %80 = arith.mulf %68, %79 : vector<8x1xf32>
    %81 = arith.addf %77, %80 : vector<8x1xf32>
    %c0_52 = arith.constant 0 : index
    %c1_53 = arith.constant 1 : index
    %82 = vector.load %arg11[%c0_52, %c1_53] : memref<8x2xf32, #tpu.memory_space<vmem>>, vector<8x1xf32>
    tpu.vector_store %arg11[%c0_52, %c1_53], %81 {strides = array<i32>} : memref<8x2xf32, #tpu.memory_space<vmem>>, vector<8x1xf32>,
    %c0_54 = arith.constant 0 : index
    %c1_55 = arith.constant 1 : index
    %83 = vector.load %arg10[%c0_54, %c1_55] : memref<8x2xf32, #tpu.memory_space<vmem>>, vector<8x1xf32>
    tpu.vector_store %arg10[%c0_54, %c1_55], %73 {strides = array<i32>} : memref<8x2xf32, #tpu.memory_space<vmem>>, vector<8x1xf32>,
    %c0_i32_56 = arith.constant 0 : i32
    %84 = arith.cmpi eq, %arg2, %c0_i32_56 : i32
    %85 = arith.extui %84 : i1 to i32
    %c0_i32_57 = arith.constant 0 : i32
    %86 = arith.cmpi ne, %85, %c0_i32_57 : i32
    scf.if %86 {
      %c0_60 = arith.constant 0 : index
      %c0_61 = arith.constant 0 : index
      %92 = vector.load %arg9[%c0_60, %c0_61] : memref<8x2xf32, #tpu.memory_space<vmem>>, vector<8x2xf32>
      %c0_62 = arith.constant 0 : index
      %c0_63 = arith.constant 0 : index
      %93 = vector.load %arg10[%c0_62, %c0_63] : memref<8x2xf32, #tpu.memory_space<vmem>>, vector<8x2xf32>
      %c0_64 = arith.constant 0 : index
      %c0_65 = arith.constant 0 : index
      %94 = vector.load %arg11[%c0_64, %c0_65] : memref<8x2xf32, #tpu.memory_space<vmem>>, vector<8x2xf32>
      %95 = math.log %94 : vector<8x2xf32>
      %96 = arith.addf %93, %95 : vector<8x2xf32>
      %97 = arith.addf %92, %96 : vector<8x2xf32>
      %c0_66 = arith.constant 0 : index
      %c0_67 = arith.constant 0 : index
      %98 = vector.load %arg9[%c0_66, %c0_67] : memref<8x2xf32, #tpu.memory_space<vmem>>, vector<8x2xf32>
      tpu.vector_store %arg9[%c0_66, %c0_67], %97 {strides = array<i32>} : memref<8x2xf32, #tpu.memory_space<vmem>>, vector<8x2xf32>,
    } else {
    }
    %c3_i32 = arith.constant 3 : i32
    %87 = arith.cmpi eq, %arg1, %c3_i32 : i32
    %c0_i32_58 = arith.constant 0 : i32
    %88 = arith.cmpi eq, %arg2, %c0_i32_58 : i32
    %89 = arith.andi %87, %88 : i1
    %90 = arith.extui %89 : i1 to i32
    %c0_i32_59 = arith.constant 0 : i32
    %91 = arith.cmpi ne, %90, %c0_i32_59 : i32
    scf.if %91 {
      %c0_60 = arith.constant 0 : index
      %c0_61 = arith.constant 0 : index
      %92 = vector.load %arg8[%c0_60, %c0_61] : memref<8x2xf32, #tpu.memory_space<vmem>>, vector<8x2xf32>
      %c0_62 = arith.constant 0 : index
      %c0_63 = arith.constant 0 : index
      %c0_64 = arith.constant 0 : index
      %c0_65 = arith.constant 0 : index
      %93 = vector.load %arg7[%c0_62, %c0_63, %c0_64, %c0_65] : memref<2x1x8x2xf32, #tpu.memory_space<vmem>>, vector<1x1x8x2xf32>
      %94 = vector.shape_cast %93 : vector<1x1x8x2xf32> to vector<8x2xf32>
      %95 = vector.shape_cast %92 : vector<8x2xf32> to vector<1x1x8x2xf32>
      tpu.vector_store %arg7[%c0_62, %c0_63, %c0_64, %c0_65], %95 {strides = array<i32>} : memref<2x1x8x2xf32, #tpu.memory_space<vmem>>, vector<1x1x8x2xf32>,
      %c0_66 = arith.constant 0 : index
      %c0_67 = arith.constant 0 : index
      %96 = vector.load %arg9[%c0_66, %c0_67] : memref<8x2xf32, #tpu.memory_space<vmem>>, vector<8x2xf32>
      %c1_68 = arith.constant 1 : index
      %c0_69 = arith.constant 0 : index
      %c0_70 = arith.constant 0 : index
      %c0_71 = arith.constant 0 : index
      %97 = vector.load %arg7[%c1_68, %c0_69, %c0_70, %c0_71] : memref<2x1x8x2xf32, #tpu.memory_space<vmem>>, vector<1x1x8x2xf32>
      %98 = vector.shape_cast %97 : vector<1x1x8x2xf32> to vector<8x2xf32>
      %99 = vector.shape_cast %96 : vector<8x2xf32> to vector<1x1x8x2xf32>
      tpu.vector_store %arg7[%c1_68, %c0_69, %c0_70, %c0_71], %99 {strides = array<i32>} : memref<2x1x8x2xf32, #tpu.memory_space<vmem>>, vector<1x1x8x2xf32>,
    } else {
    }
    return
  }
  func.func @transform_0(%arg0: i32, %arg1: i32, %arg2: i32) -> (i32, i32) {
    %c0_i32 = arith.constant 0 : i32
    %c0_i32_0 = arith.constant 0 : i32
    %c0_i32_1 = arith.constant 0 : i32
    return %c0_i32, %c0_i32_0 : i32, i32
  }
  func.func @transform_1(%arg0: i32, %arg1: i32, %arg2: i32) -> (i32, i32, i32, i32) {
    %c0_i32 = arith.constant 0 : i32
    %c0_i32_0 = arith.constant 0 : i32
    return %arg1, %arg0, %c0_i32, %arg2 : i32, i32, i32, i32
  }
  func.func @transform_2(%arg0: i32, %arg1: i32, %arg2: i32) -> (i32, i32, i32, i32) {
    %c0_i32 = arith.constant 0 : i32
    %c0_i32_0 = arith.constant 0 : i32
    return %arg1, %arg0, %c0_i32, %arg2 : i32, i32, i32, i32
  }
  func.func @transform_3(%arg0: i32, %arg1: i32, %arg2: i32) -> (i32, i32, i32) {
    %c0_i32 = arith.constant 0 : i32
    %c0_i32_0 = arith.constant 0 : i32
    %c0_i32_1 = arith.constant 0 : i32
    return %arg1, %c0_i32, %c0_i32_0 : i32, i32, i32
  }
  func.func @transform_4(%arg0: i32, %arg1: i32, %arg2: i32) -> (i32, i32, i32, i32) {
    %c0_i32 = arith.constant 0 : i32
    %c0_i32_0 = arith.constant 0 : i32
    %c0_i32_1 = arith.constant 0 : i32
    %c0_i32_2 = arith.constant 0 : i32
    return %c0_i32, %arg0, %c0_i32_0, %c0_i32_1 : i32, i32, i32, i32
  }
}

</mosaic_0001>

<llo_original>
// kernel: tjdist_forward.1
$region0: #{tjdist_forward.1}
  #allocation0 [shape = 'u32[]', space=smem, size = 0x4, offset = 0x4, fixed_abs, tag = 'smem constant byte address 0x4 - core index']
  #allocation1 [shape = 'u32[72,128]{1,0:T(1,128)}', space=vmem, size = 0x9000, scoped, tag = 'internal scratch']
  #allocation2 [shape = 'f32[8,2]{1,0:T(8,128)}', space=vmem, size = 0x1000, scoped, tag = 'scratch operand']
  #allocation3 [shape = 'f32[8,2]{1,0:T(8,128)}', space=vmem, size = 0x1000, scoped, tag = 'scratch operand']
  #allocation4 [shape = 'f32[8,2]{1,0:T(8,128)}', space=vmem, size = 0x1000, scoped, tag = 'scratch operand']
  #allocation5 [shape = 'f32[8,2]{1,0:T(8,128)}', space=vmem, size = 0x1000, scoped, tag = 'scratch operand']
  %s0 = inlined_call_operand.vmem [shape: bf16[8,32], index: 0, kind: input, shape index: {}]
  %s1 = inlined_call_operand.vmem [shape: bf16[4,4,32,256], index: 1, kind: input, shape index: {}]
  %s2 = inlined_call_operand.vmem [shape: f32[4,4,1,256], index: 2, kind: input, shape index: {}]
  %s3 = inlined_call_operand.vmem [shape: s32[4,8,128], index: 3, kind: input, shape index: {}]
  %s4 = inlined_call_operand.vmem [shape: f32[2,2,8,2], index: 4, kind: output, shape index: {}]
  %s5 = sld [smem:[#allocation0]]
  $region99: #{tjdist_forward.1} parent=0
    _
  %s7 = ssub.s32 1, %s5
  %s8 = scalar_select 0, %s7, %s5
  $region1: #{tjdist_forward.1} parent=0
    #allocation6 [shape = 'u8[16384]{0}', space=vmem, size = 0x4000, scoped, tag = 'output window, operand 0']
    loop: start=0, step=1, limit=10
    $region2: #{tjdist_forward.1} parent=1 // loop_pre_header
      _
    $region3: #{tjdist_forward.1} parent=1 // loop_header
      %s10 = sphi 0, %s14
      %p11 = scmp.ge.s32.totalorder %s10, 10
      %s17 = sphi 0, %s36
      %s18 = sphi 0, %s32
      %s19 = sphi 0, %s28
      %s20 = sphi 0, %s17
      %s21 = sphi 0, %s18
      %s22 = sphi 0, %s19
      %s23 = sphi 0, %s20
      %s24 = sphi 0, %s21
      %s25 = sphi 0, %s22
      %s37 = sphi 0, %s37
      %s39 = sphi 0, %s37
      %s40 = sphi 0, %s39
      %s54 = sphi 0, %s40
      %s64 = sphi 0, %s66
      %s67 = sphi 0, %s64
      %s68 = sphi 0, %s67
      %s84 = sphi 0, %s68
      %s94 = sphi 0, %s96
      %s97 = sphi 0, %s94
      %s98 = sphi 0, %s97
      %s114 = sphi 0, %s98
      %s120 = sphi 0, %s122
      %s123 = sphi 0, %s120
      %s124 = sphi 0, %s123
      %s140 = sphi 0, %s124
      %s146 = sphi 0, %s148
      %s149 = sphi 0, %s146
      %s150 = sphi 0, %s149
      %s166 = sphi 0, %s150
    $region4: #{tjdist_forward.1} parent=1 // loop_header_branch
      %13 = sbr.rel (%p11) target = $region8
    $region5: #{tjdist_forward.1} parent=1 // loop_body
      %s15 = ssub.s32 %s10, 1
      %s16 = ssub.s32 %s10, 2
      %s26 = sadd.s32 1, %s19
      %p27 = scmp.ge.s32.totalorder %s26, 1
      %s28 = scalar_select %p27, 0, %s26
      %s29 = sadd.s32 1, %s18
      %s30 = scalar_select %p27, %s29, %s18
      %p31 = scmp.ge.s32.totalorder %s30, 4
      %s32 = scalar_select %p31, 0, %s30
      %s33 = sadd.s32 1, %s17
      %s34 = scalar_select %p31, %s33, %s17
      %p35 = scmp.ge.s32.totalorder %s34, 2
      %s36 = scalar_select %p35, 0, %s34
      %s38 = sadd.s32 %s37, 1
      %p41 = scmp.eq.s32.totalorder %s10, 7
      %p42 = scmp.ne.s32.totalorder %s37, %s39
      %p43 = scmp.eq.s32.totalorder %s10, 0
      %p44 = por %p42, %p43
      %p45 = scmp.ne.s32.totalorder %s37, %s39
      %p46 = scmp.eq.s32.totalorder %s15, 7
      %p47 = por %p45, %p46
      %p48 = scmp.ne.s32.totalorder %s39, %s40
      %p49 = scmp.eq.s32.totalorder %s15, 0
      %p50 = por %p48, %p49
      %p51 = scmp.ne.s32.totalorder %s39, %s40
      %p52 = scmp.eq.s32.totalorder %s16, 7
      %p53 = por %p51, %p52
      %p55 = scmp.ne.s32.totalorder %s40, %s54
      %p56 = scmp.eq.s32.totalorder %s16, 0
      %p57 = por %p55, %p56
      %s58 = ssub.s32 %s18, %s32
      %s59 = ssub.s32 %s17, %s36
      %s60 = sor.u32 %s58, %s59
      %s61 = ssub.s32 %s19, %s28
      %s62 = sor.u32 %s60, %s61
      %p63 = scmp.eq.s32.totalorder %s62, 0
      %s65 = sadd.s32 %s64, 1
      %s66 = scalar_select %p63, %s64, %s65
      %p69 = pneg %p63
      %p70 = scmp.eq.s32.totalorder %s10, 7
      %p71 = por %p69, %p70
      %p72 = scmp.ne.s32.totalorder %s64, %s67
      %p73 = scmp.eq.s32.totalorder %s10, 0
      %p74 = por %p72, %p73
      %p75 = scmp.ne.s32.totalorder %s64, %s67
      %p76 = scmp.eq.s32.totalorder %s15, 7
      %p77 = por %p75, %p76
      %p78 = scmp.ne.s32.totalorder %s67, %s68
      %p79 = scmp.eq.s32.totalorder %s15, 0
      %p80 = por %p78, %p79
      %p81 = scmp.ne.s32.totalorder %s67, %s68
      %p82 = scmp.eq.s32.totalorder %s16, 7
      %p83 = por %p81, %p82
      %p85 = scmp.ne.s32.totalorder %s68, %s84
      %p86 = scmp.eq.s32.totalorder %s16, 0
      %p87 = por %p85, %p86
      %s88 = ssub.s32 %s18, %s32
      %s89 = ssub.s32 %s17, %s36
      %s90 = sor.u32 %s88, %s89
      %s91 = ssub.s32 %s19, %s28
      %s92 = sor.u32 %s90, %s91
      %p93 = scmp.eq.s32.totalorder %s92, 0
      %s95 = sadd.s32 %s94, 1
      %s96 = scalar_select %p93, %s94, %s95
      %p99 = pneg %p93
      %p100 = scmp.eq.s32.totalorder %s10, 7
      %p101 = por %p99, %p100
      %p102 = scmp.ne.s32.totalorder %s94, %s97
      %p103 = scmp.eq.s32.totalorder %s10, 0
      %p104 = por %p102, %p103
      %p105 = scmp.ne.s32.totalorder %s94, %s97
      %p106 = scmp.eq.s32.totalorder %s15, 7
      %p107 = por %p105, %p106
      %p108 = scmp.ne.s32.totalorder %s97, %s98
      %p109 = scmp.eq.s32.totalorder %s15, 0
      %p110 = por %p108, %p109
      %p111 = scmp.ne.s32.totalorder %s97, %s98
      %p112 = scmp.eq.s32.totalorder %s16, 7
      %p113 = por %p111, %p112
      %p115 = scmp.ne.s32.totalorder %s98, %s114
      %p116 = scmp.eq.s32.totalorder %s16, 0
      %p117 = por %p115, %p116
      %s118 = ssub.s32 %s18, %s32
      %p119 = scmp.eq.s32.totalorder %s118, 0
      %s121 = sadd.s32 %s120, 1
      %s122 = scalar_select %p119, %s120, %s121
      %p125 = pneg %p119
      %p126 = scmp.eq.s32.totalorder %s10, 7
      %p127 = por %p125, %p126
      %p128 = scmp.ne.s32.totalorder %s120, %s123
      %p129 = scmp.eq.s32.totalorder %s10, 0
      %p130 = por %p128, %p129
      %p131 = scmp.ne.s32.totalorder %s120, %s123
      %p132 = scmp.eq.s32.totalorder %s15, 7
      %p133 = por %p131, %p132
      %p134 = scmp.ne.s32.totalorder %s123, %s124
      %p135 = scmp.eq.s32.totalorder %s15, 0
      %p136 = por %p134, %p135
      %p137 = scmp.ne.s32.totalorder %s123, %s124
      %p138 = scmp.eq.s32.totalorder %s16, 7
      %p139 = por %p137, %p138
      %p141 = scmp.ne.s32.totalorder %s124, %s140
      %p142 = scmp.eq.s32.totalorder %s16, 0
      %p143 = por %p141, %p142
      %s144 = ssub.s32 %s17, %s36
      %p145 = scmp.eq.s32.totalorder %s144, 0
      %s147 = sadd.s32 %s146, 1
      %s148 = scalar_select %p145, %s146, %s147
      %p151 = pneg %p145
      %p152 = scmp.eq.s32.totalorder %s10, 7
      %p153 = por %p151, %p152
      %p154 = scmp.ne.s32.totalorder %s146, %s149
      %p155 = scmp.eq.s32.totalorder %s10, 0
      %p156 = por %p154, %p155
      %p157 = scmp.ne.s32.totalorder %s146, %s149
      %p158 = scmp.eq.s32.totalorder %s15, 7
      %p159 = por %p157, %p158
      %p160 = scmp.ne.s32.totalorder %s149, %s150
      %p161 = scmp.eq.s32.totalorder %s15, 0
      %p162 = por %p160, %p161
      %p163 = scmp.ne.s32.totalorder %s149, %s150
      %p164 = scmp.eq.s32.totalorder %s16, 7
      %p165 = por %p163, %p164
      %p167 = scmp.ne.s32.totalorder %s150, %s166
      %p168 = scmp.eq.s32.totalorder %s16, 0
      %p169 = por %p167, %p168
      %p170 = scmp.le.s32.totalorder 1, %s10
      %p171 = scmp.lt.s32.totalorder %s10, 9
      %p172 = pnand %p170, %p171
      %p173 = pneg %p172
      // Predicated region
      $region9: #{tjdist_forward.1} parent=5 // pred_check
        _
      $region10: #{tjdist_forward.1} parent=5 // pred_check_branch
        %175 = sbr.rel (%p172) target = $region12
      $region11: #{tjdist_forward.1} parent=5 // pred_region
        %s176 = ssub.s32 %s10, 1
        // Predicated region
        $region13: #{tjdist_forward.1} parent=11 // pred_check
          %p177 = pneg %p50
        $region14: #{tjdist_forward.1} parent=11 // pred_check_branch
          %179 = sbr.rel (%p177) target = $region16
        $region15: #{tjdist_forward.1} parent=11 // pred_region
          _
        $region16: #{tjdist_forward.1} parent=11 // pred_fallthru
          _
      $region12: #{tjdist_forward.1} parent=5 // pred_fallthru
        _
      %p180 = scmp.lt.s32.totalorder %s10, 8
      // Predicated region
      $region17: #{tjdist_forward.1} parent=5 // pred_check
        %p181 = pneg %p180
      $region18: #{tjdist_forward.1} parent=5 // pred_check_branch
        %183 = sbr.rel (%p181) target = $region20
      $region19: #{tjdist_forward.1} parent=5 // pred_region
        // Predicated region
        $region21: #{tjdist_forward.1} parent=19 // pred_check
          %p184 = pneg %p74
        $region22: #{tjdist_forward.1} parent=19 // pred_check_branch
          %186 = sbr.rel (%p184) target = $region24
        $region23: #{tjdist_forward.1} parent=19 // pred_region
          %s187 = smul.u32 2, %s17
          %s188 = smul.u32 2, %s19
          %p189 = scmp.lt.s32.totalorder %s18, 3
          %s190 = scalar_select %p189, %s18, 3
          %p191 = scmp.lt.s32.totalorder %s187, 3
          %s192 = scalar_select %p191, %s187, 3
          %p193 = scmp.lt.s32.totalorder %s188, 1
          %s194 = scalar_select %p193, %s188, 1
          %s195 = smul.addr %s192, 8
          %s196 = sadd.s32 %s194, %s195
          %s197 = smul.addr %s190, 32
          %s198 = sadd.s32 %s196, %s197
          %s199 = smul.addr %s198, 4
          %s200 = scalar_lea.vmem %s1, %s199
          %s201 = smul.u32 2, %s17
          %s202 = smul.u32 2, %s19
        $region24: #{tjdist_forward.1} parent=19 // pred_fallthru
          _
        // Predicated region
        $region25: #{tjdist_forward.1} parent=19 // pred_check
          %p203 = pneg %p104
        $region26: #{tjdist_forward.1} parent=19 // pred_check_branch
          %205 = sbr.rel (%p203) target = $region28
        $region27: #{tjdist_forward.1} parent=19 // pred_region
          %s206 = smul.u32 2, %s17
          %s207 = smul.u32 2, %s19
          %p208 = scmp.lt.s32.totalorder %s18, 3
          %s209 = scalar_select %p208, %s18, 3
          %p210 = scmp.lt.s32.totalorder %s206, 3
          %s211 = scalar_select %p210, %s206, 3
          %p212 = scmp.lt.s32.totalorder %s207, 1
          %s213 = scalar_select %p212, %s207, 1
          %s214 = smul.addr %s211, 2
          %s215 = sadd.s32 %s213, %s214
          %s216 = smul.addr %s209, 8
          %s217 = sadd.s32 %s215, %s216
          %s218 = scalar_lea.vmem %s2, %s217
          %s219 = smul.u32 2, %s17
          %s220 = smul.u32 2, %s19
        $region28: #{tjdist_forward.1} parent=19 // pred_fallthru
          _
        // Predicated region
        $region29: #{tjdist_forward.1} parent=19 // pred_check
          %p221 = pneg %p130
        $region30: #{tjdist_forward.1} parent=19 // pred_check_branch
          %223 = sbr.rel (%p221) target = $region32
        $region31: #{tjdist_forward.1} parent=19 // pred_region
          %p224 = scmp.lt.s32.totalorder %s18, 3
          %s225 = scalar_select %p224, %s18, 3
          %s226 = smul.addr %s225, 8
          %s227 = scalar_lea.vmem %s3, %s226
        $region32: #{tjdist_forward.1} parent=19 // pred_fallthru
          _
      $region20: #{tjdist_forward.1} parent=5 // pred_fallthru
        _
      %p228 = scmp.le.s32.totalorder 1, %s10
      %p229 = scmp.lt.s32.totalorder %s10, 9
      %p230 = pnand %p228, %p229
      %p231 = pneg %p230
      // Predicated region
      $region33: #{tjdist_forward.1} parent=5 // pred_check
        _
      $region34: #{tjdist_forward.1} parent=5 // pred_check_branch
        %233 = sbr.rel (%p230) target = $region36
      $region35: #{tjdist_forward.1} parent=5 // pred_region
        %s234 = ssub.s32 %s10, 1
        %p235 = pneg %p50
        %p236 = pneg %p47
        %s237 = smul.u32 2, %s20
        %s238 = smul.u32 2, %s22
        %p239 = scmp.lt.s32.totalorder %s21, 3
        %s240 = scalar_select %p239, %s21, 3
        %p241 = scmp.lt.s32.totalorder %s237, 3
        %s242 = scalar_select %p241, %s237, 3
        %p243 = scmp.lt.s32.totalorder %s238, 1
        %s244 = scalar_select %p243, %s238, 1
        %s245 = smul.addr %s242, 8
        %s246 = sadd.s32 %s244, %s245
        %s247 = smul.addr %s240, 32
        %s248 = sadd.s32 %s246, %s247
        %s249 = smul.addr %s248, 4
        %s250 = scalar_lea.vmem %s1, %s249
        %p251 = pneg %p80
        %p252 = pneg %p77
        %s253 = smul.u32 2, %s20
        %s254 = smul.u32 2, %s22
        %p255 = scmp.lt.s32.totalorder %s21, 3
        %s256 = scalar_select %p255, %s21, 3
        %p257 = scmp.lt.s32.totalorder %s253, 3
        %s258 = scalar_select %p257, %s253, 3
        %p259 = scmp.lt.s32.totalorder %s254, 1
        %s260 = scalar_select %p259, %s254, 1
        %s261 = smul.addr %s258, 2
        %s262 = sadd.s32 %s260, %s261
        %s263 = smul.addr %s256, 8
        %s264 = sadd.s32 %s262, %s263
        %s265 = scalar_lea.vmem %s2, %s264
        %p266 = pneg %p110
        %p267 = pneg %p107
        %p268 = scmp.lt.s32.totalorder %s21, 3
        %s269 = scalar_select %p268, %s21, 3
        %s270 = smul.addr %s269, 8
        %s271 = scalar_lea.vmem %s3, %s270
        %p272 = pneg %p136
        %p273 = pneg %p133
        %p274 = pneg %p162
        %p275 = pneg %p159
        %s276 = sand.u32 %s149, 1
        %s277 = sand.u32 %s149, 1
        %s278 = smul.addr %s277, 16
        %s279 = scalar_lea.vmem [#allocation6], %s278
        %s280 = smul.u32 2, %s20
        %s281 = smul.u32 2, %s22
        %p282 = scmp.lt.s32.totalorder %s21, 3
        %s283 = scalar_select %p282, %s21, 3
        %p284 = scmp.lt.s32.totalorder %s280, 3
        %s285 = scalar_select %p284, %s280, 3
        %p286 = scmp.lt.s32.totalorder %s281, 1
        %s287 = scalar_select %p286, %s281, 1
        %s288 = smul.addr %s285, 8
        %s289 = sadd.s32 %s287, %s288
        %s290 = smul.addr %s283, 32
        %s291 = sadd.s32 %s289, %s290
        %s292 = smul.addr %s291, 4
        %s293 = scalar_lea.vmem %s1, %s292
        %s294 = smul.u32 2, %s20
        %s295 = smul.u32 2, %s22
        %s296 = smul.u32 2, %s20
        %s297 = smul.u32 2, %s22
        %p298 = scmp.lt.s32.totalorder %s21, 3
        %s299 = scalar_select %p298, %s21, 3
        %p300 = scmp.lt.s32.totalorder %s296, 3
        %s301 = scalar_select %p300, %s296, 3
        %p302 = scmp.lt.s32.totalorder %s297, 1
        %s303 = scalar_select %p302, %s297, 1
        %s304 = smul.addr %s301, 2
        %s305 = sadd.s32 %s303, %s304
        %s306 = smul.addr %s299, 8
        %s307 = sadd.s32 %s305, %s306
        %s308 = scalar_lea.vmem %s2, %s307
        %s309 = smul.u32 2, %s20
        %s310 = smul.u32 2, %s22
        %p311 = scmp.lt.s32.totalorder %s21, 3
        %s312 = scalar_select %p311, %s21, 3
        %s313 = smul.addr %s312, 8
        %s314 = scalar_lea.vmem %s3, %s313
        %p316 = scmp.eq.s32.totalorder %s21, 0
        %p317 = scmp.eq.s32.totalorder %s22, 0
        %p318 = pnand %p316, %p317
        %p319 = pneg %p318
        // Predicated region
        $region37: #{tjdist_forward.1} parent=35 // pred_check
          _
        $region38: #{tjdist_forward.1} parent=35 // pred_check_branch
          %321 = sbr.rel (%p318) target = $region40
        $region39: #{tjdist_forward.1} parent=35 // pred_region
          %vm322 = vcmask 15360
          %323 = vst.msk [vmem:[#allocation2] sm:$0xff] %vm322, 0.0
          %324 = vst.msk [vmem:[#allocation3] sm:$0xff] %vm322, 0.0
        $region40: #{tjdist_forward.1} parent=35 // pred_fallthru
          _
        // Predicated region
        $region41: #{tjdist_forward.1} parent=35 // pred_check
          %p325 = pneg %p317
        $region42: #{tjdist_forward.1} parent=35 // pred_check_branch
          %327 = sbr.rel (%p325) target = $region44
        $region43: #{tjdist_forward.1} parent=35 // pred_region
          %vm328 = vcmask 15360
          %329 = vst.msk [vmem:[#allocation4] sm:$0xff] %vm328, -inf
          %330 = vst.msk [vmem:[#allocation5] sm:$0xff] %vm328, 0.0
        $region44: #{tjdist_forward.1} parent=35 // pred_fallthru
          _
        %v331 = vld [vmem:[%s0] sm:$0xf]
        %v332 = vld [vmem:[%s314] sm:$0xff]
        %s333 = smul.u32 %s22, 256
        %v334 = vlaneseq
        %v335 = vand.u32 %v334, 127
        %v336 = vadd.s32 %v335, 128
        %v337 = vstv %s333
        %v338 = vadd.s32 %v337, %v335
        %v339 = vadd.s32 %v337, %v336
        %340 = vset.pattern.permute.xlu0 0
        %341 = vperm.xlu0 %340, %v332
        %v342 = vpop.permute.xlu0 %341
        %vm343 = vcmp.eq.s32.totalorder %v338, %v342
        %vm344 = vcmp.eq.s32.totalorder %v339, %v342
        %v345 = vld [vmem:[%s293] sm:$0xff]
        %v346 = vld [vmem:[%s293 + $0x8] sm:$0xff]
        %v347 = vld [vmem:[%s293 + $0x10] sm:$0xff]
        %v348 = vld [vmem:[%s293 + $0x18] sm:$0xff]
        %v349 = vld [vmem:[%s308] sm:$0x3]
        %v351 = vperm.slane %v349, 0
        %v352 = vperm.slane %v349, 1
        %v359 = vunpack.c.l.b16 %v345
        %v360 = vunpack.c.h.b16 %v345
        %v361 = vunpack.c.l.b16 %v346
        %v362 = vunpack.c.h.b16 %v346
        %v363 = vunpack.c.l.b16 %v347
        %v364 = vunpack.c.h.b16 %v347
        %v365 = vunpack.c.l.b16 %v348
        %v366 = vunpack.c.h.b16 %v348
        %v367 = vpack.c.b16 %v361, %v359
        %v368 = vpack.c.b16 %v362, %v360
        %v369 = vpack.c.b16 %v365, %v363
        %v370 = vpack.c.b16 %v366, %v364
        %vm375 = vcmask 261120
        %v377 = vsel %vm375, %v331, 0
        %379 = vmatpush.bf16.msra.mxu0 0
        %380 = vmatpush.bf16.msra.mxu0 0
        %381 = vmatpush.bf16.msra.mxu0 0
        %382 = vmatpush.bf16.msra.mxu0 0
        %383 = vmatpush.bf16.msra.mxu0 0
        %384 = vmatpush.bf16.msra.mxu0 0
        %385 = vmatpush.bf16.msra.mxu0 %v369
        %386 = vmatpush.bf16.msra.mxu0 %v367
        %387 = vmatmul.bf16.gmra.mxu0 %v377
        %v388 = vpop.f32.mrf.mxu0
        %v389 = vadd.f32 %v351, %v388
        %v390 = vpop.f32.mrf.mxu0
        %391 = vdwg.mxu0
        %392 = vmatpush.bf16.msra.mxu0 0
        %393 = vmatpush.bf16.msra.mxu0 0
        %394 = vmatpush.bf16.msra.mxu0 0
        %395 = vmatpush.bf16.msra.mxu0 0
        %396 = vmatpush.bf16.msra.mxu0 0
        %397 = vmatpush.bf16.msra.mxu0 0
        %398 = vmatpush.bf16.msra.mxu0 %v370
        %399 = vmatpush.bf16.msra.mxu0 %v368
        %400 = vmatmul.bf16.gmra.mxu0 %v377
        %v401 = vpop.f32.mrf.mxu0
        %v402 = vadd.f32 %v352, %v401
        %v403 = vpop.f32.mrf.mxu0
        %404 = vdwg.mxu0
        %v405 = vsel %vm343, %v389, 0.0
        %v406 = vsel %vm344, %v402, 0.0
        %v407 = vadd.f32 %v405, %v406
        %408 = vadd.xlane.f32.xlu0 %v407
        %v409 = vpop.xlane.xlu0 %408
        %v410 = vmax.f32 %v389, %v402
        %411 = vmax.xlane.f32.xlu0 %v410
        %v412 = vpop.xlane.xlu0 %411
        %v413 = vsub.f32 %v389, %v412
        %v414 = vsub.f32 %v402, %v412
        %v415 = vmul.f32 %v413, 1.442695
        %v416 = vpow.pop %v415
        %v417 = vmul.f32 %v414, 1.442695
        %v418 = vpow.pop %v417
        %v419 = vadd.f32 %v416, %v418
        %420 = vadd.xlane.f32.xlu0 %v419
        %v421 = vpop.xlane.xlu0 %420
        %v422 = vld [vmem:[#allocation2] sm:$0xff]
        %v423 = vadd.f32 %v422, %v409
        %vm424 = vcmask 7168
        %425 = vst.msk [vmem:[#allocation2] sm:$0xff] %vm424, %v423
        %v426 = vld [vmem:[#allocation4] sm:$0xff]
        %v427 = vmax.f32 %v426, %v412
        %v428 = vld [vmem:[#allocation5] sm:$0xff]
        %v429 = vsub.f32 %v426, %v427
        %v430 = vmul.f32 %v429, 1.442695
        %v431 = vpow.pop %v430
        %v432 = vmul.f32 %v428, %v431
        %v433 = vsub.f32 %v412, %v427
        %v434 = vmul.f32 %v433, 1.442695
        %v435 = vpow.pop %v434
        %v436 = vmul.f32 %v421, %v435
        %v437 = vadd.f32 %v432, %v436
        %438 = vst.msk [vmem:[#allocation5] sm:$0xff] %vm424, %v437
        %439 = vst.msk [vmem:[#allocation4] sm:$0xff] %vm424, %v427
        %s440 = scalar_lea.vmem %s293, 32
        %v441 = vld [vmem:[%s440] sm:$0xff]
        %v442 = vld [vmem:[%s440 + $0x8] sm:$0xff]
        %v443 = vld [vmem:[%s440 + $0x10] sm:$0xff]
        %v444 = vld [vmem:[%s440 + $0x18] sm:$0xff]
        %s445 = scalar_lea.vmem %s308, 2
        %v446 = vld [vmem:[%s445] sm:$0x3]
        %v448 = vperm.slane %v446, 0
        %v449 = vperm.slane %v446, 1
        %v456 = vunpack.c.l.b16 %v441
        %v457 = vunpack.c.h.b16 %v441
        %v458 = vunpack.c.l.b16 %v442
        %v459 = vunpack.c.h.b16 %v442
        %v460 = vunpack.c.l.b16 %v443
        %v461 = vunpack.c.h.b16 %v443
        %v462 = vunpack.c.l.b16 %v444
        %v463 = vunpack.c.h.b16 %v444
        %v464 = vpack.c.b16 %v458, %v456
        %v465 = vpack.c.b16 %v459, %v457
        %v466 = vpack.c.b16 %v462, %v460
        %v467 = vpack.c.b16 %v463, %v461
        %472 = vmatpush.bf16.msra.mxu0 0
        %473 = vmatpush.bf16.msra.mxu0 0
        %474 = vmatpush.bf16.msra.mxu0 0
        %475 = vmatpush.bf16.msra.mxu0 0
        %476 = vmatpush.bf16.msra.mxu0 0
        %477 = vmatpush.bf16.msra.mxu0 0
        %478 = vmatpush.bf16.msra.mxu0 %v466
        %479 = vmatpush.bf16.msra.mxu0 %v464
        %480 = vmatmul.bf16.gmra.mxu0 %v377
        %v481 = vpop.f32.mrf.mxu0
        %v482 = vadd.f32 %v448, %v481
        %v483 = vpop.f32.mrf.mxu0
        %484 = vdwg.mxu0
        %485 = vmatpush.bf16.msra.mxu0 0
        %486 = vmatpush.bf16.msra.mxu0 0
        %487 = vmatpush.bf16.msra.mxu0 0
        %488 = vmatpush.bf16.msra.mxu0 0
        %489 = vmatpush.bf16.msra.mxu0 0
        %490 = vmatpush.bf16.msra.mxu0 0
        %491 = vmatpush.bf16.msra.mxu0 %v467
        %492 = vmatpush.bf16.msra.mxu0 %v465
        %493 = vmatmul.bf16.gmra.mxu0 %v377
        %v494 = vpop.f32.mrf.mxu0
        %v495 = vadd.f32 %v449, %v494
        %v496 = vpop.f32.mrf.mxu0
        %497 = vdwg.mxu0
        %v498 = vsel %vm343, %v482, 0.0
        %v499 = vsel %vm344, %v495, 0.0
        %v500 = vadd.f32 %v498, %v499
        %501 = vadd.xlane.f32.xlu0 %v500
        %v502 = vpop.xlane.xlu0 %501
        %v503 = vmax.f32 %v482, %v495
        %504 = vmax.xlane.f32.xlu0 %v503
        %v505 = vpop.xlane.xlu0 %504
        %v506 = vsub.f32 %v482, %v505
        %v507 = vsub.f32 %v495, %v505
        %v508 = vmul.f32 %v506, 1.442695
        %v509 = vpow.pop %v508
        %v510 = vmul.f32 %v507, 1.442695
        %v511 = vpow.pop %v510
        %v512 = vadd.f32 %v509, %v511
        %513 = vadd.xlane.f32.xlu0 %v512
        %v514 = vpop.xlane.xlu0 %513
        %v515 = vld [vmem:[#allocation2] sm:$0xff]
        %v516 = vadd.f32 %v515, %v502
        %vm517 = vcmask 15368
        %518 = vst.msk [vmem:[#allocation2] sm:$0xff] %vm517, %v516
        %v519 = vld [vmem:[#allocation4] sm:$0xff]
        %v520 = vmax.f32 %v519, %v505
        %v521 = vld [vmem:[#allocation5] sm:$0xff]
        %v522 = vsub.f32 %v519, %v520
        %v523 = vmul.f32 %v522, 1.442695
        %v524 = vpow.pop %v523
        %v525 = vmul.f32 %v521, %v524
        %v526 = vsub.f32 %v505, %v520
        %v527 = vmul.f32 %v526, 1.442695
        %v528 = vpow.pop %v527
        %v529 = vmul.f32 %v514, %v528
        %v530 = vadd.f32 %v525, %v529
        %531 = vst.msk [vmem:[#allocation5] sm:$0xff] %vm517, %v530
        %532 = vst.msk [vmem:[#allocation4] sm:$0xff] %vm517, %v520
        // Predicated region
        $region45: #{tjdist_forward.1} parent=35 // pred_check
          %p533 = pneg %p317
        $region46: #{tjdist_forward.1} parent=35 // pred_check_branch
          %535 = sbr.rel (%p533) target = $region48
        $region47: #{tjdist_forward.1} parent=35 // pred_region
          %v536 = vld [vmem:[#allocation3] sm:$0xff]
          %v537 = vld [vmem:[#allocation4] sm:$0xff]
          %v538 = vld [vmem:[#allocation5] sm:$0xff]
          %v539 = vlog2.pop %v538
          %v540 = vmul.f32 %v539, 0.6931472
          %v541 = vadd.f32 %v537, %v540
          %v542 = vadd.f32 %v536, %v541
          %vm543 = vcmask 15360
          %544 = vst.msk [vmem:[#allocation3] sm:$0xff] %vm543, %v542
        $region48: #{tjdist_forward.1} parent=35 // pred_fallthru
          _
        %p545 = scmp.eq.s32.totalorder %s21, 3
        %p546 = pnand %p545, %p317
        %p547 = pneg %p546
        // Predicated region
        $region49: #{tjdist_forward.1} parent=35 // pred_check
          _
        $region50: #{tjdist_forward.1} parent=35 // pred_check_branch
          %549 = sbr.rel (%p546) target = $region52
        $region51: #{tjdist_forward.1} parent=35 // pred_region
          %v550 = vld [vmem:[#allocation2] sm:$0xff]
          %vm551 = vcmask 15360
          %552 = vst.msk [vmem:[%s279] sm:$0xff] %vm551, %v550
          %v553 = vld [vmem:[#allocation3] sm:$0xff]
          %s554 = scalar_lea.vmem %s279, 8 [#allocation6]
          %555 = vst.msk [vmem:[%s554] sm:$0xff] %vm551, %v553
        $region52: #{tjdist_forward.1} parent=35 // pred_fallthru
          _
        %s556 = sand.u32 %s149, 1
        %s557 = sand.u32 %s149, 1
        %s558 = smul.addr %s557, 16
        %s559 = scalar_lea.vmem [#allocation6], %s558
        // Predicated region
        $region53: #{tjdist_forward.1} parent=35 // pred_check
          %p560 = pneg %p159
        $region54: #{tjdist_forward.1} parent=35 // pred_check_branch
          %562 = sbr.rel (%p560) target = $region56
        $region55: #{tjdist_forward.1} parent=35 // pred_region
          %s563 = smul.addr %s20, 8
          %s564 = scalar_lea.vmem %s4, %s563
          // Predicated region
          $region57: #{tjdist_forward.1} parent=55 // pred_check
            _
          $region58: #{tjdist_forward.1} parent=55 // pred_check_branch
            %566 = sbr.rel (0) target = $region60
          $region59: #{tjdist_forward.1} parent=55 // pred_region
            // Predicated region
            $region61: #{tjdist_forward.1} parent=59 // pred_check
              _
            $region62: #{tjdist_forward.1} parent=59 // pred_check_branch
              %568 = sbr.rel (0) target = $region64
            $region63: #{tjdist_forward.1} parent=59 // pred_region
              // Predicated region
              $region76: #{tjdist_forward.1} parent=63 // pred_check
                _
              $region77: #{tjdist_forward.1} parent=63 // pred_check_branch
                %586 = sbr.rel (0) target = $region79
              $region78: #{tjdist_forward.1} parent=63 // pred_region
                loop: start=0, step=1, limit=1
                $region80: #{tjdist_forward.1} parent=78 // loop_pre_header
                  _
                $region81: #{tjdist_forward.1} parent=78 // loop_header
                  %s588 = sphi 0, %s592
                  %p589 = scmp.ge.s32.totalorder %s588, 1
                  %s593 = sphi %s559, %s559
                  %s594 = sphi %s564, %s564
                $region82: #{tjdist_forward.1} parent=78 // loop_header_branch
                  %591 = sbr.rel (%p589) target = $region86
                $region83: #{tjdist_forward.1} parent=78 // loop_body
                  %v595 = vld [vmem:[%s593] sm:$0xff]
                  %596 = vst [vmem:[%s594] sm:$0xff] %v595
                  %v597 = vld [vmem:[%s593 + $0x8] sm:$0xff]
                  %598 = vst [vmem:[%s594 + $0x10] sm:$0xff] %v597
                $region84: #{tjdist_forward.1} parent=78 // loop_footer
                  %s592 = sadd.s32 1, %s588
                $region85: #{tjdist_forward.1} parent=78 // loop_footer_branch
                  %587 = sbr.rel target = $region81
                $region86: #{tjdist_forward.1} parent=78 // loop_exit
                  _
              $region79: #{tjdist_forward.1} parent=63 // pred_fallthru
                _
              // Predicated region
              $region87: #{tjdist_forward.1} parent=63 // pred_check
                _
              $region88: #{tjdist_forward.1} parent=63 // pred_check_branch
                %600 = sbr.rel target = $region90
              $region89: #{tjdist_forward.1} parent=63 // pred_region
                _
              $region90: #{tjdist_forward.1} parent=63 // pred_fallthru
                _
            $region64: #{tjdist_forward.1} parent=59 // pred_fallthru
              _
            // Predicated region
            $region65: #{tjdist_forward.1} parent=59 // pred_check
              _
            $region66: #{tjdist_forward.1} parent=59 // pred_check_branch
              %570 = sbr.rel target = $region68
            $region67: #{tjdist_forward.1} parent=59 // pred_region
              %s572 = ssub.s32 256, 1
              loop: start=0, step=1, limit=1
              $region69: #{tjdist_forward.1} parent=67 // loop_pre_header
                _
              $region70: #{tjdist_forward.1} parent=67 // loop_header
                %s574 = sphi 0, %s578
                %p575 = scmp.ge.s32.totalorder %s574, 1
                %s579 = sphi %s559, %s559
                %s580 = sphi %s564, %s564
              $region71: #{tjdist_forward.1} parent=67 // loop_header_branch
                %577 = sbr.rel (%p575) target = $region75
              $region72: #{tjdist_forward.1} parent=67 // loop_body
                %v581 = vld [vmem:[%s579] sm:%s572]
                %582 = vst [vmem:[%s580] sm:%s572] %v581
                %v583 = vld [vmem:[%s579 + $0x8] sm:%s572]
                %584 = vst [vmem:[%s580 + $0x10] sm:%s572] %v583
              $region73: #{tjdist_forward.1} parent=67 // loop_footer
                %s578 = sadd.s32 1, %s574
              $region74: #{tjdist_forward.1} parent=67 // loop_footer_branch
                %573 = sbr.rel target = $region70
              $region75: #{tjdist_forward.1} parent=67 // loop_exit
                _
            $region68: #{tjdist_forward.1} parent=59 // pred_fallthru
              _
          $region60: #{tjdist_forward.1} parent=55 // pred_fallthru
            _
          %601 = vnop
        $region56: #{tjdist_forward.1} parent=35 // pred_fallthru
          _
      $region36: #{tjdist_forward.1} parent=5 // pred_fallthru
        _
      %p602 = scmp.le.s32.totalorder 2, %s10
      // Predicated region
      $region91: #{tjdist_forward.1} parent=5 // pred_check
        %p603 = pneg %p602
      $region92: #{tjdist_forward.1} parent=5 // pred_check_branch
        %605 = sbr.rel (%p603) target = $region94
      $region93: #{tjdist_forward.1} parent=5 // pred_region
        %s606 = ssub.s32 %s10, 2
        // Predicated region
        $region95: #{tjdist_forward.1} parent=93 // pred_check
          %p607 = pneg %p165
        $region96: #{tjdist_forward.1} parent=93 // pred_check_branch
          %609 = sbr.rel (%p607) target = $region98
        $region97: #{tjdist_forward.1} parent=93 // pred_region
          %s610 = sand.u32 %s150, 1
          %s611 = sand.u32 %s150, 1
          %s612 = smul.addr %s611, 16
          %s613 = scalar_lea.vmem [#allocation6], %s612
        $region98: #{tjdist_forward.1} parent=93 // pred_fallthru
          _
      $region94: #{tjdist_forward.1} parent=5 // pred_fallthru
        _
    $region6: #{tjdist_forward.1} parent=1 // loop_footer
      %s14 = sadd.s32 1, %s10
    $region7: #{tjdist_forward.1} parent=1 // loop_footer_branch
      %9 = sbr.rel target = $region3
    $region8: #{tjdist_forward.1} parent=1 // loop_exit
      _

</llo_original>
